<compile_context>
chip_gen: v7x
topology: tpu7x:2x2x1
jax: 0.10.0
libtpu: 0.0.40
codegen_flags: <defaults>
</compile_context>

<pallas_src>
import math

import jax
import jax.numpy as jnp
from jax.experimental import pallas as pl
from jax.experimental.pallas import tpu as pltpu


# ---------------------------------------------------------------------------
# Pallas kernel: one fused LSTM cell step (one batch tile)
# ---------------------------------------------------------------------------
def _lstm_cell_kernel(x_ref, h0_ref, c0_ref, w_x_ref, w_h_ref, b_ref,
                      h1_ref, c1_ref):
    hp = h1_ref.shape[-1]          # padded hidden size (multiple of 128)

    # Two MXU matmuls on fused, pre-transposed weights + one bias add.
    gates = (jnp.dot(x_ref[...], w_x_ref[...],
                     preferred_element_type=jnp.float32)
             + jnp.dot(h0_ref[...], w_h_ref[...],
                       preferred_element_type=jnp.float32)
             + b_ref[...])                                     # [tb, 4*Hp]

    # Fused gate layout: i | f | o | c  (lane-aligned slices).
    sig = jax.nn.sigmoid(gates[:, :3 * hp])                    # one EUP pass
    gate_i = sig[:, 0 * hp:1 * hp]
    gate_f = sig[:, 1 * hp:2 * hp]
    gate_o = sig[:, 2 * hp:3 * hp]
    gate_c = jnp.tanh(gates[:, 3 * hp:4 * hp])

    c1 = gate_f * c0_ref[...] + gate_i * gate_c
    c1_ref[...] = c1
    h1_ref[...] = gate_o * jnp.tanh(c1)


# ---------------------------------------------------------------------------
# Wrapper: padding, weight fusion / pre-transpose, pallas_call
# ---------------------------------------------------------------------------
def _round_up(n, m):
    return (n + m - 1) // m * m


def _pad2d(a, rows, cols):
    out = jnp.zeros((rows, cols), jnp.float32)
    return out.at[:a.shape[0], :a.shape[1]].set(a.astype(jnp.float32))


def fuse_lstm_params(p, input_size, hidden_size):
    """Fuse the 8 untied weights / 4 biases into padded, pre-transposed
    right-hand-side matmul operands (done once, outside the kernel).
    Fused gate order along the output lanes: i | f | o | c."""
    ip = _round_up(input_size, 128)
    hp = _round_up(hidden_size, 128)
    w_x = jnp.zeros((ip, 4 * hp), jnp.float32)
    w_h = jnp.zeros((hp, 4 * hp), jnp.float32)
    b = jnp.zeros((1, 4 * hp), jnp.float32)
    for g, n in enumerate(('i', 'f', 'o', 'c')):
        w_x = w_x.at[:input_size, g * hp:g * hp + hidden_size].set(
            p['w_x' + n].T)
        w_h = w_h.at[:hidden_size, g * hp:g * hp + hidden_size].set(
            p['w_h' + n].T)
        b = b.at[0, g * hp:g * hp + hidden_size].set(p['b_' + n])
    return w_x, w_h, b


def lstm_cell_untied_forward(x, hidden, fused, *, batch_tile=256):
    """x: [B, inputSize], hidden=(h0, c0) each [B, hiddenSize].
    Returns (h1, c1), each [B, hiddenSize] float32."""
    h0, c0 = hidden
    w_x, w_h, b = fused
    B = x.shape[0]
    H = h0.shape[1]
    ip = w_x.shape[0]
    hp = w_h.shape[0]

    tb = min(_round_up(B, 8), batch_tile)   # batch tile (multiple of 8)
    bp = _round_up(B, tb)
    n_b = bp // tb

    x_p = _pad2d(x, bp, ip)
    h_p = _pad2d(h0, bp, hp)
    c_p = _pad2d(c0, bp, hp)

    h1_p, c1_p = pl.pallas_call(
        _lstm_cell_kernel,
        grid=(n_b,),
        in_specs=[
            pl.BlockSpec((tb, ip), lambda i: (i, 0)),        # x tile
            pl.BlockSpec((tb, hp), lambda i: (i, 0)),        # h0 tile
            pl.BlockSpec((tb, hp), lambda i: (i, 0)),        # c0 tile
            pl.BlockSpec((ip, 4 * hp), lambda i: (0, 0)),    # W_x (resident)
            pl.BlockSpec((hp, 4 * hp), lambda i: (0, 0)),    # W_h (resident)
            pl.BlockSpec((1, 4 * hp), lambda i: (0, 0)),     # bias (resident)
        ],
        out_specs=(
            pl.BlockSpec((tb, hp), lambda i: (i, 0)),
            pl.BlockSpec((tb, hp), lambda i: (i, 0)),
        ),
        out_shape=(jax.ShapeDtypeStruct((bp, hp), jnp.float32),
                   jax.ShapeDtypeStruct((bp, hp), jnp.float32)),
        compiler_params=pltpu.CompilerParams(
            dimension_semantics=("parallel",)),
    )(x_p, h_p, c_p, w_x, w_h, b)

    return h1_p[:B, :H], c1_p[:B, :H]


# ---------------------------------------------------------------------------
# Parameter init (mirrors reset_parameters: uniform(-std, std))
# ---------------------------------------------------------------------------
def init_lstm_cell_params(key, input_size, hidden_size):
    std = 1.0 / math.sqrt(hidden_size)
    shapes = dict(
        w_xi=(hidden_size, input_size), w_xf=(hidden_size, input_size),
        w_xc=(hidden_size, input_size), w_xo=(hidden_size, input_size),
        w_hi=(hidden_size, hidden_size), w_hf=(hidden_size, hidden_size),
        w_hc=(hidden_size, hidden_size), w_ho=(hidden_size, hidden_size),
        b_i=(hidden_size,), b_f=(hidden_size,),
        b_c=(hidden_size,), b_o=(hidden_size,),
    )
    keys = jax.random.split(key, len(shapes))
    return {name: jax.random.uniform(k, shape, jnp.float32, -std, std)
            for (name, shape), k in zip(shapes.items(), keys)}


# ---------------------------------------------------------------------------
# Pure-JAX reference (for correctness check)
# ---------------------------------------------------------------------------
def lstm_cell_untied_ref(x, hidden, p):
    h0, c0 = hidden
    gi = x @ p['w_xi'].T + h0 @ p['w_hi'].T + p['b_i']
    gf = x @ p['w_xf'].T + h0 @ p['w_hf'].T + p['b_f']
    gc = x @ p['w_xc'].T + h0 @ p['w_hc'].T + p['b_c']
    go = x @ p['w_xo'].T + h0 @ p['w_ho'].T + p['b_o']
    gate_i = jax.nn.sigmoid(gi)
    gate_f = jax.nn.sigmoid(gf)
    gate_c = jnp.tanh(gc)
    gate_o = jax.nn.sigmoid(go)
    c1 = gate_f * c0 + gate_i * gate_c
    h1 = gate_o * jnp.tanh(c1)
    return h1, c1


if __name__ == "__main__":
    B, input_size, hidden_size = 2, 16, 32

    key = jax.random.PRNGKey(0)
    kx, kh, kc, kp = jax.random.split(key, 4)
    x = jax.random.normal(kx, (B, input_size), jnp.float32)
    h0 = jax.random.normal(kh, (B, hidden_size), jnp.float32)
    c0 = jax.random.normal(kc, (B, hidden_size), jnp.float32)

    params = init_lstm_cell_params(kp, input_size, hidden_size)
    fused = fuse_lstm_params(params, input_size, hidden_size)

    h1, c1 = lstm_cell_untied_forward(x, (h0, c0), fused)
    jax.block_until_ready((h1, c1))

    h1_ref, c1_ref = lstm_cell_untied_ref(x, (h0, c0), params)
    jax.block_until_ready((h1_ref, c1_ref))

    assert h1.shape == (B, hidden_size)
    assert c1.shape == (B, hidden_size)
    assert jnp.allclose(h1, h1_ref, rtol=1e-3, atol=1e-3)
    assert jnp.allclose(c1, c1_ref, rtol=1e-3, atol=1e-3)

    print("KERNEL_OK")
</pallas_src>

<mosaic_0001>
module attributes {stable_mosaic.version = 11 : i64} {
  func.func @_lstm_cell_kernel(%arg0: i32, %arg1: memref<8x128xf32, #tpu.memory_space<vmem>>, %arg2: memref<8x128xf32, #tpu.memory_space<vmem>>, %arg3: memref<8x128xf32, #tpu.memory_space<vmem>>, %arg4: memref<128x512xf32, #tpu.memory_space<vmem>>, %arg5: memref<128x512xf32, #tpu.memory_space<vmem>>, %arg6: memref<1x512xf32, #tpu.memory_space<vmem>>, %arg7: memref<8x128xf32, #tpu.memory_space<vmem>>, %arg8: memref<8x128xf32, #tpu.memory_space<vmem>>) attributes {dimension_semantics = [#tpu.dimension_semantics<parallel>], iteration_bounds = array<i64: 1>, scalar_prefetch = 0 : i64, scratch_operands = 0 : i64, tpu.core_type = #tpu.core_type<tc>, window_params = [{transform_indices = @transform_0, window_bounds = array<i64: 8, 128>}, {transform_indices = @transform_1, window_bounds = array<i64: 8, 128>}, {transform_indices = @transform_2, window_bounds = array<i64: 8, 128>}, {pipeline_mode = #tpu.pipeline_mode<synchronous>, transform_indices = @transform_3, window_bounds = array<i64: 128, 512>}, {pipeline_mode = #tpu.pipeline_mode<synchronous>, transform_indices = @transform_4, window_bounds = array<i64: 128, 512>}, {pipeline_mode = #tpu.pipeline_mode<synchronous>, transform_indices = @transform_5, window_bounds = array<i64: 1, 512>}, {transform_indices = @transform_6, window_bounds = array<i64: 8, 128>}, {transform_indices = @transform_7, window_bounds = array<i64: 8, 128>}]} {
    %c0 = arith.constant 0 : index
    %c0_0 = arith.constant 0 : index
    %0 = vector.load %arg1[%c0, %c0_0] : memref<8x128xf32, #tpu.memory_space<vmem>>, vector<8x128xf32>
    %c0_1 = arith.constant 0 : index
    %c0_2 = arith.constant 0 : index
    %1 = vector.load %arg4[%c0_1, %c0_2] : memref<128x512xf32, #tpu.memory_space<vmem>>, vector<128x512xf32>
    %cst = arith.constant dense<0.000000e+00> : vector<8x512xf32>
    %2 = tpu.matmul %0, %1, %cst {dimension_numbers = #tpu.dot_dimension_numbers<[1], [0], [0], [1], [0, 0, 1, 1], [], []>} : vector<8x128xf32>, vector<128x512xf32>, vector<8x512xf32> -> vector<8x512xf32>
    %c0_3 = arith.constant 0 : index
    %c0_4 = arith.constant 0 : index
    %3 = vector.load %arg2[%c0_3, %c0_4] : memref<8x128xf32, #tpu.memory_space<vmem>>, vector<8x128xf32>
    %c0_5 = arith.constant 0 : index
    %c0_6 = arith.constant 0 : index
    %4 = vector.load %arg5[%c0_5, %c0_6] : memref<128x512xf32, #tpu.memory_space<vmem>>, vector<128x512xf32>
    %cst_7 = arith.constant dense<0.000000e+00> : vector<8x512xf32>
    %5 = tpu.matmul %3, %4, %cst_7 {dimension_numbers = #tpu.dot_dimension_numbers<[1], [0], [0], [1], [0, 0, 1, 1], [], []>} : vector<8x128xf32>, vector<128x512xf32>, vector<8x512xf32> -> vector<8x512xf32>
    %6 = arith.addf %2, %5 : vector<8x512xf32>
    %c0_8 = arith.constant 0 : index
    %c0_9 = arith.constant 0 : index
    %7 = vector.load %arg6[%c0_8, %c0_9] : memref<1x512xf32, #tpu.memory_space<vmem>>, vector<1x512xf32>
    %8 = vector.broadcast %7 : vector<1x512xf32> to vector<8x512xf32>
    %9 = arith.addf %6, %8 : vector<8x512xf32>
    %10 = vector.extract_strided_slice %9 {offsets = [0, 0], sizes = [8, 384], strides = [1, 1]} : vector<8x512xf32> to vector<8x384xf32>
    %11 = arith.negf %10 : vector<8x384xf32>
    %12 = math.exp %11 : vector<8x384xf32>
    %cst_10 = arith.constant 1.000000e+00 : f32
    %13 = vector.broadcast %cst_10 : f32 to vector<8x384xf32>
    %14 = arith.addf %13, %12 : vector<8x384xf32>
    %15 = arith.divf %13, %14 : vector<8x384xf32>
    %16 = vector.extract_strided_slice %15 {offsets = [0, 0], sizes = [8, 128], strides = [1, 1]} : vector<8x384xf32> to vector<8x128xf32>
    %17 = vector.extract_strided_slice %15 {offsets = [0, 128], sizes = [8, 128], strides = [1, 1]} : vector<8x384xf32> to vector<8x128xf32>
    %18 = vector.extract_strided_slice %15 {offsets = [0, 256], sizes = [8, 128], strides = [1, 1]} : vector<8x384xf32> to vector<8x128xf32>
    %19 = vector.extract_strided_slice %9 {offsets = [0, 384], sizes = [8, 128], strides = [1, 1]} : vector<8x512xf32> to vector<8x128xf32>
    %20 = math.tanh %19 : vector<8x128xf32>
    %c0_11 = arith.constant 0 : index
    %c0_12 = arith.constant 0 : index
    %21 = vector.load %arg3[%c0_11, %c0_12] : memref<8x128xf32, #tpu.memory_space<vmem>>, vector<8x128xf32>
    %22 = arith.mulf %17, %21 : vector<8x128xf32>
    %23 = arith.mulf %16, %20 : vector<8x128xf32>
    %24 = arith.addf %22, %23 : vector<8x128xf32>
    %c0_13 = arith.constant 0 : index
    %c0_14 = arith.constant 0 : index
    %25 = vector.load %arg8[%c0_13, %c0_14] : memref<8x128xf32, #tpu.memory_space<vmem>>, vector<8x128xf32>
    tpu.vector_store %arg8[%c0_13, %c0_14], %24 {strides = array<i32>} : memref<8x128xf32, #tpu.memory_space<vmem>>, vector<8x128xf32>,
    %26 = math.tanh %24 : vector<8x128xf32>
    %27 = arith.mulf %18, %26 : vector<8x128xf32>
    %c0_15 = arith.constant 0 : index
    %c0_16 = arith.constant 0 : index
    %28 = vector.load %arg7[%c0_15, %c0_16] : memref<8x128xf32, #tpu.memory_space<vmem>>, vector<8x128xf32>
    tpu.vector_store %arg7[%c0_15, %c0_16], %27 {strides = array<i32>} : memref<8x128xf32, #tpu.memory_space<vmem>>, vector<8x128xf32>,
    return
  }
  func.func @transform_0(%arg0: i32) -> (i32, i32) {
    %c0_i32 = arith.constant 0 : i32
    %c0_i32_0 = arith.constant 0 : i32
    return %arg0, %c0_i32 : i32, i32
  }
  func.func @transform_1(%arg0: i32) -> (i32, i32) {
    %c0_i32 = arith.constant 0 : i32
    %c0_i32_0 = arith.constant 0 : i32
    return %arg0, %c0_i32 : i32, i32
  }
  func.func @transform_2(%arg0: i32) -> (i32, i32) {
    %c0_i32 = arith.constant 0 : i32
    %c0_i32_0 = arith.constant 0 : i32
    return %arg0, %c0_i32 : i32, i32
  }
  func.func @transform_3(%arg0: i32) -> (i32, i32) {
    %c0_i32 = arith.constant 0 : i32
    %c0_i32_0 = arith.constant 0 : i32
    %c0_i32_1 = arith.constant 0 : i32
    return %c0_i32, %c0_i32_0 : i32, i32
  }
  func.func @transform_4(%arg0: i32) -> (i32, i32) {
    %c0_i32 = arith.constant 0 : i32
    %c0_i32_0 = arith.constant 0 : i32
    %c0_i32_1 = arith.constant 0 : i32
    return %c0_i32, %c0_i32_0 : i32, i32
  }
  func.func @transform_5(%arg0: i32) -> (i32, i32) {
    %c0_i32 = arith.constant 0 : i32
    %c0_i32_0 = arith.constant 0 : i32
    %c0_i32_1 = arith.constant 0 : i32
    return %c0_i32, %c0_i32_0 : i32, i32
  }
  func.func @transform_6(%arg0: i32) -> (i32, i32) {
    %c0_i32 = arith.constant 0 : i32
    %c0_i32_0 = arith.constant 0 : i32
    return %arg0, %c0_i32 : i32, i32
  }
  func.func @transform_7(%arg0: i32) -> (i32, i32) {
    %c0_i32 = arith.constant 0 : i32
    %c0_i32_0 = arith.constant 0 : i32
    return %arg0, %c0_i32 : i32, i32
  }
}

</mosaic_0001>

<llo_original>
// kernel: tpu_custom_call.1
$region0: #{tpu_custom_call.1}
  #allocation0 [shape = 'u32[]', space=smem, size = 0x4, offset = 0x4, fixed_abs, tag = 'smem constant byte address 0x4 - core index']
  #allocation1 [shape = 'u32[144,128]{1,0:T(1,128)}', space=vmem, size = 0x12000, scoped, tag = 'internal scratch']
  %s0 = inlined_call_operand.hbm [shape: f32[8,128], index: 0, kind: input, shape index: {}]
  %s1 = inlined_call_operand.hbm [shape: f32[8,128], index: 1, kind: input, shape index: {}]
  %s2 = inlined_call_operand.hbm [shape: f32[8,128], index: 2, kind: input, shape index: {}]
  %s3 = inlined_call_operand.hbm [shape: f32[128,512], index: 3, kind: input, shape index: {}]
  %s4 = inlined_call_operand.hbm [shape: f32[128,512], index: 4, kind: input, shape index: {}]
  %s5 = inlined_call_operand.vmem [shape: f32[1,512], index: 5, kind: input, shape index: {}]
  %s6 = inlined_call_operand.hbm [shape: f32[8,128], index: 6, kind: output, shape index: {0}]
  %s7 = inlined_call_operand.hbm [shape: f32[8,128], index: 7, kind: output, shape index: {1}]
  %8 = xla_tuple %s6, %s7
  %s9 = sld [smem:[#allocation0]]
  $region62: #{tpu_custom_call.1} parent=0
    _
  %s11 = ssub.s32 1, %s9
  %s12 = scalar_select 0, %s11, %s9
  $region1: #{tpu_custom_call.1} parent=0
    #allocation2 [shape = 'u8[4096]{0}', space=vmem, size = 0x1000, scoped, tag = 'input window, operand 0, single buffered']
    #allocation3 [shape = 's32[1]{0}', space=sflag, size = 0x4, scoped, tag = 'scoped memory for tpu_custom_call.1']
    #allocation4 [shape = 's32[1]{0}', space=sflag, size = 0x4, scoped, tag = 'scoped memory for tpu_custom_call.1']
    #allocation5 [shape = 'u8[4096]{0}', space=vmem, size = 0x1000, scoped, tag = 'input window, operand 1, single buffered']
    #allocation6 [shape = 's32[1]{0}', space=sflag, size = 0x4, scoped, tag = 'scoped memory for tpu_custom_call.1']
    #allocation7 [shape = 'u8[4096]{0}', space=vmem, size = 0x1000, scoped, tag = 'input window, operand 2, single buffered']
    #allocation8 [shape = 'u8[262144]{0}', space=vmem, size = 0x40000, scoped, tag = 'input window, operand 3, single buffered']
    #allocation9 [shape = 's32[1]{0}', space=sflag, size = 0x4, scoped, tag = 'scoped memory for tpu_custom_call.1']
    #allocation10 [shape = 'u8[262144]{0}', space=vmem, size = 0x40000, scoped, tag = 'input window, operand 4, single buffered']
    #allocation11 [shape = 'u8[4096]{0}', space=vmem, size = 0x1000, scoped, tag = 'output window, operand 0, single buffered']
    #allocation12 [shape = 'u8[4096]{0}', space=vmem, size = 0x1000, scoped, tag = 'output window, operand 1, single buffered']
    #allocation13 [shape = 's32[1]{0}', space=sflag, size = 0x4, scoped, tag = 'scoped memory for tpu_custom_call.1']
    %13 = vsyncpa [#allocation3], 0
    %14 = vsyncpa [#allocation6], 0
    %15 = vsyncpa [#allocation9], 0
    %16 = vsyncpa [#allocation4], 0
    %17 = vsyncpa [#allocation13], 0
    // Predicated region
    $region2: #{tpu_custom_call.1} parent=1 // pred_check
      _
    $region3: #{tpu_custom_call.1} parent=1 // pred_check_branch
      %19 = sbr.rel (0) target = $region5
    $region4: #{tpu_custom_call.1} parent=1 // pred_region
      %s21 = ssub.s32 128, 128
      %22 = vsyncadd [#allocation3], %s21
      %s24 = sshll.u32 [#allocation2], 4
      %s25 = int_to_ptr.vmem [resolvable:$true] %s24
      %27 = dma.hbm_to_vmem [thread:$0]  %s0, 128, %s25, [#allocation3]
    $region5: #{tpu_custom_call.1} parent=1 // pred_fallthru
      _
    // Predicated region
    $region6: #{tpu_custom_call.1} parent=1 // pred_check
      _
    $region7: #{tpu_custom_call.1} parent=1 // pred_check_branch
      %29 = sbr.rel (0) target = $region9
    $region8: #{tpu_custom_call.1} parent=1 // pred_region
      %s31 = ssub.s32 128, 128
      %32 = vsyncadd [#allocation6], %s31
      %s34 = sshll.u32 [#allocation5], 4
      %s35 = int_to_ptr.vmem [resolvable:$true] %s34
      %37 = dma.hbm_to_vmem [thread:$0]  %s1, 128, %s35, [#allocation6]
    $region9: #{tpu_custom_call.1} parent=1 // pred_fallthru
      _
    // Predicated region
    $region10: #{tpu_custom_call.1} parent=1 // pred_check
      _
    $region11: #{tpu_custom_call.1} parent=1 // pred_check_branch
      %39 = sbr.rel (0) target = $region13
    $region12: #{tpu_custom_call.1} parent=1 // pred_region
      %s41 = ssub.s32 128, 128
      %42 = vsyncadd [#allocation6], %s41
      %s44 = sshll.u32 [#allocation7], 4
      %s45 = int_to_ptr.vmem [resolvable:$true] %s44
      %47 = dma.hbm_to_vmem [thread:$0]  %s2, 128, %s45, [#allocation6]
    $region13: #{tpu_custom_call.1} parent=1 // pred_fallthru
      _
    // Predicated region
    $region14: #{tpu_custom_call.1} parent=1 // pred_check
      _
    $region15: #{tpu_custom_call.1} parent=1 // pred_check_branch
      %49 = sbr.rel (0) target = $region17
    $region16: #{tpu_custom_call.1} parent=1 // pred_region
      %s51 = ssub.s32 8192, 8192
      %52 = vsyncadd [#allocation9], %s51
      %s53 = sshll.u32 [#allocation8], 4
      %s54 = int_to_ptr.vmem [resolvable:$true] %s53
      %59 = dma.hbm_to_vmem [thread:$0]  %s3, 8192, %s54, [#allocation9], 512, 512, 32
    $region17: #{tpu_custom_call.1} parent=1 // pred_fallthru
      _
    // Predicated region
    $region18: #{tpu_custom_call.1} parent=1 // pred_check
      _
    $region19: #{tpu_custom_call.1} parent=1 // pred_check_branch
      %61 = sbr.rel (0) target = $region21
    $region20: #{tpu_custom_call.1} parent=1 // pred_region
      %s63 = ssub.s32 8192, 8192
      %64 = vsyncadd [#allocation9], %s63
      %s65 = sshll.u32 [#allocation10], 4
      %s66 = int_to_ptr.vmem [resolvable:$true] %s65
      %71 = dma.hbm_to_vmem [thread:$0]  %s4, 8192, %s66, [#allocation9], 512, 512, 32
    $region21: #{tpu_custom_call.1} parent=1 // pred_fallthru
      _
    // Predicated region
    $region22: #{tpu_custom_call.1} parent=1 // pred_check
      _
    $region23: #{tpu_custom_call.1} parent=1 // pred_check_branch
      %73 = sbr.rel (0) target = $region25
    $region24: #{tpu_custom_call.1} parent=1 // pred_region
      _
    $region25: #{tpu_custom_call.1} parent=1 // pred_fallthru
      _
    // Predicated region
    $region26: #{tpu_custom_call.1} parent=1 // pred_check
      _
    $region27: #{tpu_custom_call.1} parent=1 // pred_check_branch
      %75 = sbr.rel (0) target = $region29
    $region28: #{tpu_custom_call.1} parent=1 // pred_region
      %76 = dma.done [#allocation3], 128
    $region29: #{tpu_custom_call.1} parent=1 // pred_fallthru
      _
    // Predicated region
    $region30: #{tpu_custom_call.1} parent=1 // pred_check
      _
    $region31: #{tpu_custom_call.1} parent=1 // pred_check_branch
      %78 = sbr.rel (0) target = $region33
    $region32: #{tpu_custom_call.1} parent=1 // pred_region
      %79 = dma.done [#allocation6], 128
    $region33: #{tpu_custom_call.1} parent=1 // pred_fallthru
      _
    // Predicated region
    $region34: #{tpu_custom_call.1} parent=1 // pred_check
      _
    $region35: #{tpu_custom_call.1} parent=1 // pred_check_branch
      %81 = sbr.rel (0) target = $region37
    $region36: #{tpu_custom_call.1} parent=1 // pred_region
      %82 = dma.done [#allocation6], 128
    $region37: #{tpu_custom_call.1} parent=1 // pred_fallthru
      _
    // Predicated region
    $region38: #{tpu_custom_call.1} parent=1 // pred_check
      _
    $region39: #{tpu_custom_call.1} parent=1 // pred_check_branch
      %84 = sbr.rel (0) target = $region41
    $region40: #{tpu_custom_call.1} parent=1 // pred_region
      %85 = dma.done [#allocation9], 8192
    $region41: #{tpu_custom_call.1} parent=1 // pred_fallthru
      _
    // Predicated region
    $region42: #{tpu_custom_call.1} parent=1 // pred_check
      _
    $region43: #{tpu_custom_call.1} parent=1 // pred_check_branch
      %87 = sbr.rel (0) target = $region45
    $region44: #{tpu_custom_call.1} parent=1 // pred_region
      %88 = dma.done [#allocation9], 8192
    $region45: #{tpu_custom_call.1} parent=1 // pred_fallthru
      _
    %v89 = vld [vmem:[#allocation2] sm:$0xff]
    %v90 = vld [vmem:[#allocation8] sm:$0xff]
    %v91 = vld [vmem:[#allocation8 + $0x8] sm:$0xff]
    %v92 = vld [vmem:[#allocation8 + $0x10] sm:$0xff]
    %v93 = vld [vmem:[#allocation8 + $0x18] sm:$0xff]
    %v94 = vld [vmem:[#allocation8 + $0x20] sm:$0xff]
    %v95 = vld [vmem:[#allocation8 + $0x28] sm:$0xff]
    %v96 = vld [vmem:[#allocation8 + $0x30] sm:$0xff]
    %v97 = vld [vmem:[#allocation8 + $0x38] sm:$0xff]
    %v98 = vld [vmem:[#allocation8 + $0x40] sm:$0xff]
    %v99 = vld [vmem:[#allocation8 + $0x48] sm:$0xff]
    %v100 = vld [vmem:[#allocation8 + $0x50] sm:$0xff]
    %v101 = vld [vmem:[#allocation8 + $0x58] sm:$0xff]
    %v102 = vld [vmem:[#allocation8 + $0x60] sm:$0xff]
    %v103 = vld [vmem:[#allocation8 + $0x68] sm:$0xff]
    %v104 = vld [vmem:[#allocation8 + $0x70] sm:$0xff]
    %v105 = vld [vmem:[#allocation8 + $0x78] sm:$0xff]
    %v106 = vld [vmem:[#allocation8 + $0x80] sm:$0xff]
    %v107 = vld [vmem:[#allocation8 + $0x88] sm:$0xff]
    %v108 = vld [vmem:[#allocation8 + $0x90] sm:$0xff]
    %v109 = vld [vmem:[#allocation8 + $0x98] sm:$0xff]
    %v110 = vld [vmem:[#allocation8 + $0xa0] sm:$0xff]
    %v111 = vld [vmem:[#allocation8 + $0xa8] sm:$0xff]
    %v112 = vld [vmem:[#allocation8 + $0xb0] sm:$0xff]
    %v113 = vld [vmem:[#allocation8 + $0xb8] sm:$0xff]
    %v114 = vld [vmem:[#allocation8 + $0xc0] sm:$0xff]
    %v115 = vld [vmem:[#allocation8 + $0xc8] sm:$0xff]
    %v116 = vld [vmem:[#allocation8 + $0xd0] sm:$0xff]
    %v117 = vld [vmem:[#allocation8 + $0xd8] sm:$0xff]
    %v118 = vld [vmem:[#allocation8 + $0xe0] sm:$0xff]
    %v119 = vld [vmem:[#allocation8 + $0xe8] sm:$0xff]
    %v120 = vld [vmem:[#allocation8 + $0xf0] sm:$0xff]
    %v121 = vld [vmem:[#allocation8 + $0xf8] sm:$0xff]
    %v122 = vld [vmem:[#allocation8 + $0x100] sm:$0xff]
    %v123 = vld [vmem:[#allocation8 + $0x108] sm:$0xff]
    %v124 = vld [vmem:[#allocation8 + $0x110] sm:$0xff]
    %v125 = vld [vmem:[#allocation8 + $0x118] sm:$0xff]
    %v126 = vld [vmem:[#allocation8 + $0x120] sm:$0xff]
    %v127 = vld [vmem:[#allocation8 + $0x128] sm:$0xff]
    %v128 = vld [vmem:[#allocation8 + $0x130] sm:$0xff]
    %v129 = vld [vmem:[#allocation8 + $0x138] sm:$0xff]
    %v130 = vld [vmem:[#allocation8 + $0x140] sm:$0xff]
    %v131 = vld [vmem:[#allocation8 + $0x148] sm:$0xff]
    %v132 = vld [vmem:[#allocation8 + $0x150] sm:$0xff]
    %v133 = vld [vmem:[#allocation8 + $0x158] sm:$0xff]
    %v134 = vld [vmem:[#allocation8 + $0x160] sm:$0xff]
    %v135 = vld [vmem:[#allocation8 + $0x168] sm:$0xff]
    %v136 = vld [vmem:[#allocation8 + $0x170] sm:$0xff]
    %v137 = vld [vmem:[#allocation8 + $0x178] sm:$0xff]
    %v138 = vld [vmem:[#allocation8 + $0x180] sm:$0xff]
    %v139 = vld [vmem:[#allocation8 + $0x188] sm:$0xff]
    %v140 = vld [vmem:[#allocation8 + $0x190] sm:$0xff]
    %v141 = vld [vmem:[#allocation8 + $0x198] sm:$0xff]
    %v142 = vld [vmem:[#allocation8 + $0x1a0] sm:$0xff]
    %v143 = vld [vmem:[#allocation8 + $0x1a8] sm:$0xff]
    %v144 = vld [vmem:[#allocation8 + $0x1b0] sm:$0xff]
    %v145 = vld [vmem:[#allocation8 + $0x1b8] sm:$0xff]
    %v146 = vld [vmem:[#allocation8 + $0x1c0] sm:$0xff]
    %v147 = vld [vmem:[#allocation8 + $0x1c8] sm:$0xff]
    %v148 = vld [vmem:[#allocation8 + $0x1d0] sm:$0xff]
    %v149 = vld [vmem:[#allocation8 + $0x1d8] sm:$0xff]
    %v150 = vld [vmem:[#allocation8 + $0x1e0] sm:$0xff]
    %v151 = vld [vmem:[#allocation8 + $0x1e8] sm:$0xff]
    %v152 = vld [vmem:[#allocation8 + $0x1f0] sm:$0xff]
    %v153 = vld [vmem:[#allocation8 + $0x1f8] sm:$0xff]
    %v154 = vld [vmem:[#allocation5] sm:$0xff]
    %v155 = vld [vmem:[#allocation10] sm:$0xff]
    %v156 = vld [vmem:[#allocation10 + $0x8] sm:$0xff]
    %v157 = vld [vmem:[#allocation10 + $0x10] sm:$0xff]
    %v158 = vld [vmem:[#allocation10 + $0x18] sm:$0xff]
    %v159 = vld [vmem:[#allocation10 + $0x20] sm:$0xff]
    %v160 = vld [vmem:[#allocation10 + $0x28] sm:$0xff]
    %v161 = vld [vmem:[#allocation10 + $0x30] sm:$0xff]
    %v162 = vld [vmem:[#allocation10 + $0x38] sm:$0xff]
    %v163 = vld [vmem:[#allocation10 + $0x40] sm:$0xff]
    %v164 = vld [vmem:[#allocation10 + $0x48] sm:$0xff]
    %v165 = vld [vmem:[#allocation10 + $0x50] sm:$0xff]
    %v166 = vld [vmem:[#allocation10 + $0x58] sm:$0xff]
    %v167 = vld [vmem:[#allocation10 + $0x60] sm:$0xff]
    %v168 = vld [vmem:[#allocation10 + $0x68] sm:$0xff]
    %v169 = vld [vmem:[#allocation10 + $0x70] sm:$0xff]
    %v170 = vld [vmem:[#allocation10 + $0x78] sm:$0xff]
    %v171 = vld [vmem:[#allocation10 + $0x80] sm:$0xff]
    %v172 = vld [vmem:[#allocation10 + $0x88] sm:$0xff]
    %v173 = vld [vmem:[#allocation10 + $0x90] sm:$0xff]
    %v174 = vld [vmem:[#allocation10 + $0x98] sm:$0xff]
    %v175 = vld [vmem:[#allocation10 + $0xa0] sm:$0xff]
    %v176 = vld [vmem:[#allocation10 + $0xa8] sm:$0xff]
    %v177 = vld [vmem:[#allocation10 + $0xb0] sm:$0xff]
    %v178 = vld [vmem:[#allocation10 + $0xb8] sm:$0xff]
    %v179 = vld [vmem:[#allocation10 + $0xc0] sm:$0xff]
    %v180 = vld [vmem:[#allocation10 + $0xc8] sm:$0xff]
    %v181 = vld [vmem:[#allocation10 + $0xd0] sm:$0xff]
    %v182 = vld [vmem:[#allocation10 + $0xd8] sm:$0xff]
    %v183 = vld [vmem:[#allocation10 + $0xe0] sm:$0xff]
    %v184 = vld [vmem:[#allocation10 + $0xe8] sm:$0xff]
    %v185 = vld [vmem:[#allocation10 + $0xf0] sm:$0xff]
    %v186 = vld [vmem:[#allocation10 + $0xf8] sm:$0xff]
    %v187 = vld [vmem:[#allocation10 + $0x100] sm:$0xff]
    %v188 = vld [vmem:[#allocation10 + $0x108] sm:$0xff]
    %v189 = vld [vmem:[#allocation10 + $0x110] sm:$0xff]
    %v190 = vld [vmem:[#allocation10 + $0x118] sm:$0xff]
    %v191 = vld [vmem:[#allocation10 + $0x120] sm:$0xff]
    %v192 = vld [vmem:[#allocation10 + $0x128] sm:$0xff]
    %v193 = vld [vmem:[#allocation10 + $0x130] sm:$0xff]
    %v194 = vld [vmem:[#allocation10 + $0x138] sm:$0xff]
    %v195 = vld [vmem:[#allocation10 + $0x140] sm:$0xff]
    %v196 = vld [vmem:[#allocation10 + $0x148] sm:$0xff]
    %v197 = vld [vmem:[#allocation10 + $0x150] sm:$0xff]
    %v198 = vld [vmem:[#allocation10 + $0x158] sm:$0xff]
    %v199 = vld [vmem:[#allocation10 + $0x160] sm:$0xff]
    %v200 = vld [vmem:[#allocation10 + $0x168] sm:$0xff]
    %v201 = vld [vmem:[#allocation10 + $0x170] sm:$0xff]
    %v202 = vld [vmem:[#allocation10 + $0x178] sm:$0xff]
    %v203 = vld [vmem:[#allocation10 + $0x180] sm:$0xff]
    %v204 = vld [vmem:[#allocation10 + $0x188] sm:$0xff]
    %v205 = vld [vmem:[#allocation10 + $0x190] sm:$0xff]
    %v206 = vld [vmem:[#allocation10 + $0x198] sm:$0xff]
    %v207 = vld [vmem:[#allocation10 + $0x1a0] sm:$0xff]
    %v208 = vld [vmem:[#allocation10 + $0x1a8] sm:$0xff]
    %v209 = vld [vmem:[#allocation10 + $0x1b0] sm:$0xff]
    %v210 = vld [vmem:[#allocation10 + $0x1b8] sm:$0xff]
    %v211 = vld [vmem:[#allocation10 + $0x1c0] sm:$0xff]
    %v212 = vld [vmem:[#allocation10 + $0x1c8] sm:$0xff]
    %v213 = vld [vmem:[#allocation10 + $0x1d0] sm:$0xff]
    %v214 = vld [vmem:[#allocation10 + $0x1d8] sm:$0xff]
    %v215 = vld [vmem:[#allocation10 + $0x1e0] sm:$0xff]
    %v216 = vld [vmem:[#allocation10 + $0x1e8] sm:$0xff]
    %v217 = vld [vmem:[#allocation10 + $0x1f0] sm:$0xff]
    %v218 = vld [vmem:[#allocation10 + $0x1f8] sm:$0xff]
    %219 = vmatprep.subr.mxu0 %v156
    %220 = vmatpush1.msra.mxu0 %v155
    %221 = vmatprep.subr.mxu0 %v160
    %222 = vmatpush1.msra.mxu0 %v159
    %223 = vmatprep.subr.mxu0 %v164
    %224 = vmatpush1.msra.mxu0 %v163
    %225 = vmatprep.subr.mxu0 %v168
    %226 = vmatpush1.msra.mxu0 %v167
    %227 = vmatprep.subr.mxu0 %v172
    %228 = vmatpush1.msra.mxu0 %v171
    %229 = vmatprep.subr.mxu0 %v176
    %230 = vmatpush1.msra.mxu0 %v175
    %231 = vmatprep.subr.mxu0 %v180
    %232 = vmatpush1.msra.mxu0 %v179
    %233 = vmatprep.subr.mxu0 %v184
    %234 = vmatpush1.msra.mxu0 %v183
    %235 = vmatprep.subr.mxu0 %v188
    %236 = vmatpush1.msra.mxu0 %v187
    %237 = vmatprep.subr.mxu0 %v192
    %238 = vmatpush1.msra.mxu0 %v191
    %239 = vmatprep.subr.mxu0 %v196
    %240 = vmatpush1.msra.mxu0 %v195
    %241 = vmatprep.subr.mxu0 %v200
    %242 = vmatpush1.msra.mxu0 %v199
    %243 = vmatprep.subr.mxu0 %v204
    %244 = vmatpush1.msra.mxu0 %v203
    %245 = vmatprep.subr.mxu0 %v208
    %246 = vmatpush1.msra.mxu0 %v207
    %247 = vmatprep.subr.mxu0 %v212
    %248 = vmatpush1.msra.mxu0 %v211
    %249 = vmatprep.subr.mxu0 %v216
    %250 = vmatpush1.msra.mxu0 %v215
    %251 = vmatprep.subr.mxu0 0.0
    %252 = vmatpush1.msra.mxu0 0.0
    %253 = vmatprep.subr.mxu0 0.0
    %254 = vmatpush1.msra.mxu0 0.0
    %255 = vmatprep.subr.mxu0 0.0
    %256 = vmatpush1.msra.mxu0 0.0
    %257 = vmatprep.subr.mxu0 0.0
    %258 = vmatpush1.msra.mxu0 0.0
    %259 = vmatprep.subr.mxu0 0.0
    %260 = vmatpush1.msra.mxu0 0.0
    %261 = vmatprep.subr.mxu0 0.0
    %262 = vmatpush1.msra.mxu0 0.0
    %263 = vmatprep.subr.mxu0 0.0
    %264 = vmatpush1.msra.mxu0 0.0
    %265 = vmatprep.subr.mxu0 0.0
    %266 = vmatpush1.msra.mxu0 0.0
    %267 = vmatprep.subr.mxu0 0.0
    %268 = vmatpush1.msra.mxu0 0.0
    %269 = vmatprep.subr.mxu0 0.0
    %270 = vmatpush1.msra.mxu0 0.0
    %271 = vmatprep.subr.mxu0 0.0
    %272 = vmatpush1.msra.mxu0 0.0
    %273 = vmatprep.subr.mxu0 0.0
    %274 = vmatpush1.msra.mxu0 0.0
    %275 = vmatprep.subr.mxu0 0.0
    %276 = vmatpush1.msra.mxu0 0.0
    %277 = vmatprep.subr.mxu0 0.0
    %278 = vmatpush1.msra.mxu0 0.0
    %279 = vmatprep.subr.mxu0 0.0
    %280 = vmatpush1.msra.mxu0 0.0
    %281 = vmatprep.subr.mxu0 0.0
    %282 = vmatpush1.msra.mxu0 0.0
    %283 = vmatprep.mubr.f32.mxu0 0.0
    %284 = vmatmul.mubr.f32.gmra.mrb[0].mxu0 %v154
    %v285 = vpop.f32.mrb[0].mxu0
    %v286 = vadd.f32 0.0, %v285
    %v287 = vpop.f32.mrb[0].mxu0
    %v288 = vadd.f32 0.0, %v287
    %289 = vdwg.mxu0
    %290 = vmatprep.subr.mxu0 %v158
    %291 = vmatpush1.msra.mxu0 %v157
    %292 = vmatprep.subr.mxu0 %v162
    %293 = vmatpush1.msra.mxu0 %v161
    %294 = vmatprep.subr.mxu0 %v166
    %295 = vmatpush1.msra.mxu0 %v165
    %296 = vmatprep.subr.mxu0 %v170
    %297 = vmatpush1.msra.mxu0 %v169
    %298 = vmatprep.subr.mxu0 %v174
    %299 = vmatpush1.msra.mxu0 %v173
    %300 = vmatprep.subr.mxu0 %v178
    %301 = vmatpush1.msra.mxu0 %v177
    %302 = vmatprep.subr.mxu0 %v182
    %303 = vmatpush1.msra.mxu0 %v181
    %304 = vmatprep.subr.mxu0 %v186
    %305 = vmatpush1.msra.mxu0 %v185
    %306 = vmatprep.subr.mxu0 %v190
    %307 = vmatpush1.msra.mxu0 %v189
    %308 = vmatprep.subr.mxu0 %v194
    %309 = vmatpush1.msra.mxu0 %v193
    %310 = vmatprep.subr.mxu0 %v198
    %311 = vmatpush1.msra.mxu0 %v197
    %312 = vmatprep.subr.mxu0 %v202
    %313 = vmatpush1.msra.mxu0 %v201
    %314 = vmatprep.subr.mxu0 %v206
    %315 = vmatpush1.msra.mxu0 %v205
    %316 = vmatprep.subr.mxu0 %v210
    %317 = vmatpush1.msra.mxu0 %v209
    %318 = vmatprep.subr.mxu0 %v214
    %319 = vmatpush1.msra.mxu0 %v213
    %320 = vmatprep.subr.mxu0 %v218
    %321 = vmatpush1.msra.mxu0 %v217
    %322 = vmatprep.subr.mxu0 0.0
    %323 = vmatpush1.msra.mxu0 0.0
    %324 = vmatprep.subr.mxu0 0.0
    %325 = vmatpush1.msra.mxu0 0.0
    %326 = vmatprep.subr.mxu0 0.0
    %327 = vmatpush1.msra.mxu0 0.0
    %328 = vmatprep.subr.mxu0 0.0
    %329 = vmatpush1.msra.mxu0 0.0
    %330 = vmatprep.subr.mxu0 0.0
    %331 = vmatpush1.msra.mxu0 0.0
    %332 = vmatprep.subr.mxu0 0.0
    %333 = vmatpush1.msra.mxu0 0.0
    %334 = vmatprep.subr.mxu0 0.0
    %335 = vmatpush1.msra.mxu0 0.0
    %336 = vmatprep.subr.mxu0 0.0
    %337 = vmatpush1.msra.mxu0 0.0
    %338 = vmatprep.subr.mxu0 0.0
    %339 = vmatpush1.msra.mxu0 0.0
    %340 = vmatprep.subr.mxu0 0.0
    %341 = vmatpush1.msra.mxu0 0.0
    %342 = vmatprep.subr.mxu0 0.0
    %343 = vmatpush1.msra.mxu0 0.0
    %344 = vmatprep.subr.mxu0 0.0
    %345 = vmatpush1.msra.mxu0 0.0
    %346 = vmatprep.subr.mxu0 0.0
    %347 = vmatpush1.msra.mxu0 0.0
    %348 = vmatprep.subr.mxu0 0.0
    %349 = vmatpush1.msra.mxu0 0.0
    %350 = vmatprep.subr.mxu0 0.0
    %351 = vmatpush1.msra.mxu0 0.0
    %352 = vmatprep.subr.mxu0 0.0
    %353 = vmatpush1.msra.mxu0 0.0
    %354 = vmatprep.mubr.f32.mxu0 0.0
    %355 = vmatmul.mubr.f32.gmra.mrb[0].mxu0 %v154
    %v356 = vpop.f32.mrb[0].mxu0
    %v357 = vadd.f32 0.0, %v356
    %v358 = vpop.f32.mrb[0].mxu0
    %v359 = vadd.f32 0.0, %v358
    %360 = vdwg.mxu0
    %361 = vmatprep.subr.mxu0 %v91
    %362 = vmatpush1.msra.mxu0 %v90
    %363 = vmatprep.subr.mxu0 %v95
    %364 = vmatpush1.msra.mxu0 %v94
    %365 = vmatprep.subr.mxu0 %v99
    %366 = vmatpush1.msra.mxu0 %v98
    %367 = vmatprep.subr.mxu0 %v103
    %368 = vmatpush1.msra.mxu0 %v102
    %369 = vmatprep.subr.mxu0 %v107
    %370 = vmatpush1.msra.mxu0 %v106
    %371 = vmatprep.subr.mxu0 %v111
    %372 = vmatpush1.msra.mxu0 %v110
    %373 = vmatprep.subr.mxu0 %v115
    %374 = vmatpush1.msra.mxu0 %v114
    %375 = vmatprep.subr.mxu0 %v119
    %376 = vmatpush1.msra.mxu0 %v118
    %377 = vmatprep.subr.mxu0 %v123
    %378 = vmatpush1.msra.mxu0 %v122
    %379 = vmatprep.subr.mxu0 %v127
    %380 = vmatpush1.msra.mxu0 %v126
    %381 = vmatprep.subr.mxu0 %v131
    %382 = vmatpush1.msra.mxu0 %v130
    %383 = vmatprep.subr.mxu0 %v135
    %384 = vmatpush1.msra.mxu0 %v134
    %385 = vmatprep.subr.mxu0 %v139
    %386 = vmatpush1.msra.mxu0 %v138
    %387 = vmatprep.subr.mxu0 %v143
    %388 = vmatpush1.msra.mxu0 %v142
    %389 = vmatprep.subr.mxu0 %v147
    %390 = vmatpush1.msra.mxu0 %v146
    %391 = vmatprep.subr.mxu0 %v151
    %392 = vmatpush1.msra.mxu0 %v150
    %393 = vmatprep.subr.mxu0 0.0
    %394 = vmatpush1.msra.mxu0 0.0
    %395 = vmatprep.subr.mxu0 0.0
    %396 = vmatpush1.msra.mxu0 0.0
    %397 = vmatprep.subr.mxu0 0.0
    %398 = vmatpush1.msra.mxu0 0.0
    %399 = vmatprep.subr.mxu0 0.0
    %400 = vmatpush1.msra.mxu0 0.0
    %401 = vmatprep.subr.mxu0 0.0
    %402 = vmatpush1.msra.mxu0 0.0
    %403 = vmatprep.subr.mxu0 0.0
    %404 = vmatpush1.msra.mxu0 0.0
    %405 = vmatprep.subr.mxu0 0.0
    %406 = vmatpush1.msra.mxu0 0.0
    %407 = vmatprep.subr.mxu0 0.0
    %408 = vmatpush1.msra.mxu0 0.0
    %409 = vmatprep.subr.mxu0 0.0
    %410 = vmatpush1.msra.mxu0 0.0
    %411 = vmatprep.subr.mxu0 0.0
    %412 = vmatpush1.msra.mxu0 0.0
    %413 = vmatprep.subr.mxu0 0.0
    %414 = vmatpush1.msra.mxu0 0.0
    %415 = vmatprep.subr.mxu0 0.0
    %416 = vmatpush1.msra.mxu0 0.0
    %417 = vmatprep.subr.mxu0 0.0
    %418 = vmatpush1.msra.mxu0 0.0
    %419 = vmatprep.subr.mxu0 0.0
    %420 = vmatpush1.msra.mxu0 0.0
    %421 = vmatprep.subr.mxu0 0.0
    %422 = vmatpush1.msra.mxu0 0.0
    %423 = vmatprep.subr.mxu0 0.0
    %424 = vmatpush1.msra.mxu0 0.0
    %425 = vmatprep.mubr.f32.mxu0 0.0
    %426 = vmatmul.mubr.f32.gmra.mrb[0].mxu0 %v89
    %v427 = vpop.f32.mrb[0].mxu0
    %v428 = vadd.f32 %v286, %v427
    %v429 = vpop.f32.mrb[0].mxu0
    %v430 = vadd.f32 %v288, %v429
    %431 = vdwg.mxu0
    %432 = vmatprep.subr.mxu0 %v93
    %433 = vmatpush1.msra.mxu0 %v92
    %434 = vmatprep.subr.mxu0 %v97
    %435 = vmatpush1.msra.mxu0 %v96
    %436 = vmatprep.subr.mxu0 %v101
    %437 = vmatpush1.msra.mxu0 %v100
    %438 = vmatprep.subr.mxu0 %v105
    %439 = vmatpush1.msra.mxu0 %v104
    %440 = vmatprep.subr.mxu0 %v109
    %441 = vmatpush1.msra.mxu0 %v108
    %442 = vmatprep.subr.mxu0 %v113
    %443 = vmatpush1.msra.mxu0 %v112
    %444 = vmatprep.subr.mxu0 %v117
    %445 = vmatpush1.msra.mxu0 %v116
    %446 = vmatprep.subr.mxu0 %v121
    %447 = vmatpush1.msra.mxu0 %v120
    %448 = vmatprep.subr.mxu0 %v125
    %449 = vmatpush1.msra.mxu0 %v124
    %450 = vmatprep.subr.mxu0 %v129
    %451 = vmatpush1.msra.mxu0 %v128
    %452 = vmatprep.subr.mxu0 %v133
    %453 = vmatpush1.msra.mxu0 %v132
    %454 = vmatprep.subr.mxu0 %v137
    %455 = vmatpush1.msra.mxu0 %v136
    %456 = vmatprep.subr.mxu0 %v141
    %457 = vmatpush1.msra.mxu0 %v140
    %458 = vmatprep.subr.mxu0 %v145
    %459 = vmatpush1.msra.mxu0 %v144
    %460 = vmatprep.subr.mxu0 %v149
    %461 = vmatpush1.msra.mxu0 %v148
    %462 = vmatprep.subr.mxu0 %v153
    %463 = vmatpush1.msra.mxu0 %v152
    %464 = vmatprep.subr.mxu0 0.0
    %465 = vmatpush1.msra.mxu0 0.0
    %466 = vmatprep.subr.mxu0 0.0
    %467 = vmatpush1.msra.mxu0 0.0
    %468 = vmatprep.subr.mxu0 0.0
    %469 = vmatpush1.msra.mxu0 0.0
    %470 = vmatprep.subr.mxu0 0.0
    %471 = vmatpush1.msra.mxu0 0.0
    %472 = vmatprep.subr.mxu0 0.0
    %473 = vmatpush1.msra.mxu0 0.0
    %474 = vmatprep.subr.mxu0 0.0
    %475 = vmatpush1.msra.mxu0 0.0
    %476 = vmatprep.subr.mxu0 0.0
    %477 = vmatpush1.msra.mxu0 0.0
    %478 = vmatprep.subr.mxu0 0.0
    %479 = vmatpush1.msra.mxu0 0.0
    %480 = vmatprep.subr.mxu0 0.0
    %481 = vmatpush1.msra.mxu0 0.0
    %482 = vmatprep.subr.mxu0 0.0
    %483 = vmatpush1.msra.mxu0 0.0
    %484 = vmatprep.subr.mxu0 0.0
    %485 = vmatpush1.msra.mxu0 0.0
    %486 = vmatprep.subr.mxu0 0.0
    %487 = vmatpush1.msra.mxu0 0.0
    %488 = vmatprep.subr.mxu0 0.0
    %489 = vmatpush1.msra.mxu0 0.0
    %490 = vmatprep.subr.mxu0 0.0
    %491 = vmatpush1.msra.mxu0 0.0
    %492 = vmatprep.subr.mxu0 0.0
    %493 = vmatpush1.msra.mxu0 0.0
    %494 = vmatprep.subr.mxu0 0.0
    %495 = vmatpush1.msra.mxu0 0.0
    %496 = vmatprep.mubr.f32.mxu0 0.0
    %497 = vmatmul.mubr.f32.gmra.mrb[0].mxu0 %v89
    %v498 = vpop.f32.mrb[0].mxu0
    %v499 = vadd.f32 %v357, %v498
    %v500 = vpop.f32.mrb[0].mxu0
    %v501 = vadd.f32 %v359, %v500
    %502 = vdwg.mxu0
    %v503 = vld [vmem:[%s5] sm:$0xf]
    %v505 = vlaneseq
    %v506 = vshrl.u32 %v505, 7
    %v507 = vsub.s32 0, %v506
    %v508 = vrot.slane %v503, %v507
    %v509 = vlaneseq
    %v510 = vshrl.u32 %v509, 7
    %v511 = vsub.s32 1, %v510
    %v512 = vrot.slane %v503, %v511
    %v513 = vlaneseq
    %v514 = vshrl.u32 %v513, 7
    %v515 = vsub.s32 2, %v514
    %v516 = vrot.slane %v503, %v515
    %v517 = vlaneseq
    %v518 = vshrl.u32 %v517, 7
    %v519 = vsub.s32 3, %v518
    %v520 = vrot.slane %v503, %v519
    %v525 = vadd.f32 %v428, %v508
    %v526 = vadd.f32 %v430, %v512
    %v527 = vadd.f32 %v499, %v516
    %v528 = vadd.f32 %v501, %v520
    %v529 = vxor.u32 %v525, 2147483648
    %v530 = vxor.u32 %v526, 2147483648
    %v531 = vxor.u32 %v527, 2147483648
    %v532 = vmul.f32 %v529, 1.442695
    %v533 = vpow.pop %v532
    %v534 = vmul.f32 %v530, 1.442695
    %v535 = vpow.pop %v534
    %v536 = vmul.f32 %v531, 1.442695
    %v537 = vpow.pop %v536
    %v538 = vadd.f32 %v533, 1.0
    %v539 = vadd.f32 %v535, 1.0
    %v540 = vadd.f32 %v537, 1.0
    %v541 = vrcp.pop %v538
    %v542 = vmul.f32 1.0, %v541
    %v543 = vrcp.pop %v539
    %v544 = vmul.f32 1.0, %v543
    %v545 = vrcp.pop %v540
    %v546 = vmul.f32 1.0, %v545
    %v547 = vtanh.pop %v528
    %v548 = vld [vmem:[#allocation7] sm:$0xff]
    %v549 = vmul.f32 %v544, %v548
    %v550 = vmul.f32 %v542, %v547
    %v551 = vadd.f32 %v549, %v550
    %552 = vst [vmem:[#allocation12] sm:$0xff] %v551
    %v553 = vtanh.pop %v551
    %v554 = vmul.f32 %v546, %v553
    %555 = vst [vmem:[#allocation11] sm:$0xff] %v554
    // Predicated region
    $region46: #{tpu_custom_call.1} parent=1 // pred_check
      _
    $region47: #{tpu_custom_call.1} parent=1 // pred_check_branch
      %557 = sbr.rel (0) target = $region49
    $region48: #{tpu_custom_call.1} parent=1 // pred_region
      %s559 = ssub.s32 128, 128
      %560 = vsyncadd [#allocation4], %s559
      %s562 = sshll.u32 [#allocation11], 4
      %s563 = int_to_ptr.vmem [resolvable:$true] %s562
      %565 = dma.vmem_to_hbm [thread:$0]  %s563, 128, %s6, [#allocation4]
    $region49: #{tpu_custom_call.1} parent=1 // pred_fallthru
      _
    // Predicated region
    $region50: #{tpu_custom_call.1} parent=1 // pred_check
      _
    $region51: #{tpu_custom_call.1} parent=1 // pred_check_branch
      %567 = sbr.rel (0) target = $region53
    $region52: #{tpu_custom_call.1} parent=1 // pred_region
      %s569 = ssub.s32 128, 128
      %570 = vsyncadd [#allocation13], %s569
      %s572 = sshll.u32 [#allocation12], 4
      %s573 = int_to_ptr.vmem [resolvable:$true] %s572
      %575 = dma.vmem_to_hbm [thread:$0]  %s573, 128, %s7, [#allocation13]
    $region53: #{tpu_custom_call.1} parent=1 // pred_fallthru
      _
    // Predicated region
    $region54: #{tpu_custom_call.1} parent=1 // pred_check
      _
    $region55: #{tpu_custom_call.1} parent=1 // pred_check_branch
      %577 = sbr.rel (0) target = $region57
    $region56: #{tpu_custom_call.1} parent=1 // pred_region
      %578 = dma.done [#allocation4], 128
    $region57: #{tpu_custom_call.1} parent=1 // pred_fallthru
      _
    // Predicated region
    $region58: #{tpu_custom_call.1} parent=1 // pred_check
      _
    $region59: #{tpu_custom_call.1} parent=1 // pred_check_branch
      %580 = sbr.rel (0) target = $region61
    $region60: #{tpu_custom_call.1} parent=1 // pred_region
      %581 = dma.done [#allocation13], 128
    $region61: #{tpu_custom_call.1} parent=1 // pred_fallthru
      _
    %582 = vsyncpa [#allocation3], 1
    %583 = vsyncpa [#allocation6], 1
    %584 = vsyncpa [#allocation9], 1
    %585 = vsyncpa [#allocation4], 1
    %586 = vsyncpa [#allocation13], 1

</llo_original>
